<compile_context>
chip_gen: v5e
topology: v5e:2x2
jax: 0.10.0
libtpu: 0.0.40
codegen_flags: <defaults>
</compile_context>

<pallas_src>
import math
import functools

import jax
import jax.numpy as jnp
from jax.experimental import pallas as pl
from jax.experimental.pallas import tpu as pltpu


# ---------------------------------------------------------------------------
# helpers
# ---------------------------------------------------------------------------
def _round_up(x, m):
    return ((x + m - 1) // m) * m


def _pick_chunk(t, max_chunk):
    c = min(t, max_chunk)
    while t % c != 0:
        c -= 1
    return c


def _vmem_limit(nbytes):
    # generous headroom, but never ask for more than v7x's 64 MiB physical VMEM
    return int(min(max(2 * nbytes, 32 * 1024 * 1024), 64 * 1024 * 1024))


def _pad2(a, rows, cols):
    return jnp.pad(a, ((0, rows - a.shape[0]), (0, cols - a.shape[1])))


# ---------------------------------------------------------------------------
# Tiled matmul + bias kernel:  out = x @ w + b
# Used for (1) the hoisted LSTM input projection and (2) the classifier head.
# ---------------------------------------------------------------------------
def _matmul_bias_kernel(x_ref, w_ref, b_ref, o_ref, acc_ref):
    k = pl.program_id(2)

    @pl.when(k == 0)
    def _():
        acc_ref[...] = jnp.zeros_like(acc_ref)

    acc_ref[...] += jnp.dot(x_ref[...], w_ref[...],
                            preferred_element_type=jnp.float32)

    @pl.when(k == pl.num_programs(2) - 1)
    def _():
        o_ref[...] = (acc_ref[...]
                      + b_ref[...].astype(jnp.float32)).astype(o_ref.dtype)


def run_matmul_bias(x, w, b, *, out_dtype=None, tm=256, tk=512, tn=512):
    """x: (M, K), w: (K, N), b: (1, N) -> (M, N). Pads internally to tile multiples."""
    M, K = x.shape
    Kw, N = w.shape
    assert K == Kw
    out_dtype = jnp.dtype(out_dtype if out_dtype is not None else x.dtype)

    tm = min(tm, _round_up(M, 8))
    tk = min(tk, _round_up(K, 128))
    tn = min(tn, _round_up(N, 128))
    Mp, Kp, Np = _round_up(M, tm), _round_up(K, tk), _round_up(N, tn)

    xp = jnp.pad(x, ((0, Mp - M), (0, Kp - K))) if (Mp, Kp) != (M, K) else x
    wp = jnp.pad(w, ((0, Kp - K), (0, Np - N))) if (Kp, Np) != (K, N) else w
    bp = jnp.pad(b, ((0, 0), (0, Np - N))) if Np != N else b

    grid = (Mp // tm, Np // tn, Kp // tk)
    nbytes = (2 * (tm * tk * xp.dtype.itemsize + tk * tn * wp.dtype.itemsize
                   + tn * bp.dtype.itemsize + tm * tn * out_dtype.itemsize)
              + tm * tn * 4)

    out = pl.pallas_call(
        _matmul_bias_kernel,
        out_shape=jax.ShapeDtypeStruct((Mp, Np), out_dtype),
        grid_spec=pltpu.PrefetchScalarGridSpec(
            num_scalar_prefetch=0,
            grid=grid,
            in_specs=[pl.BlockSpec((tm, tk), lambda i, j, k: (i, k)),
                      pl.BlockSpec((tk, tn), lambda i, j, k: (k, j)),
                      pl.BlockSpec((1, tn), lambda i, j, k: (0, j))],
            out_specs=pl.BlockSpec((tm, tn), lambda i, j, k: (i, j)),
            scratch_shapes=[pltpu.VMEM((tm, tn), jnp.float32)]),
        compiler_params=pltpu.CompilerParams(
            dimension_semantics=("parallel", "parallel", "arbitrary"),
            vmem_limit_bytes=_vmem_limit(nbytes)),
        cost_estimate=pl.CostEstimate(
            flops=2 * Mp * Np * Kp,
            transcendentals=0,
            bytes_accessed=(Mp * Kp * xp.dtype.itemsize
                            + Kp * Np * wp.dtype.itemsize
                            + Mp * Np * out_dtype.itemsize)),
    )(xp, wp, bp)
    return out[:M, :N]


# ---------------------------------------------------------------------------
# LSTM recurrence kernel: gates_x are precomputed (hoisted x@W_ih + b), so each
# step only does h_prev @ W_hh + gates_x[t] and the gate nonlinearities.
# Grid is over time chunks; an unrolled in-kernel loop walks the chunk with h/c
# carried in registers; VMEM scratch carries h/c across chunks.
# Gate order matches PyTorch LSTM: i, f, g, o.
# ---------------------------------------------------------------------------
def _lstm_recurrence_kernel(gx_ref, whh_ref, out_ref, hN_ref, cN_ref,
                            h_scr, c_scr, *, tchunk, hidden):
    chunk = pl.program_id(0)

    @pl.when(chunk == 0)
    def _():
        h_scr[...] = jnp.zeros_like(h_scr)
        c_scr[...] = jnp.zeros_like(c_scr)

    whh = whh_ref[...]          # hoisted, loop-invariant
    H = hidden                  # padded hidden size (multiple of 128)

    def step(t, carry):
        h_prev, c_prev = carry
        gates = gx_ref[t].astype(jnp.float32) + jnp.dot(
            h_prev.astype(whh.dtype), whh, preferred_element_type=jnp.float32)
        i_g = jax.nn.sigmoid(gates[:, 0 * H:1 * H])
        f_g = jax.nn.sigmoid(gates[:, 1 * H:2 * H])
        g_g = jnp.tanh(gates[:, 2 * H:3 * H])
        o_g = jax.nn.sigmoid(gates[:, 3 * H:4 * H])
        c_new = f_g * c_prev + i_g * g_g
        h_new = o_g * jnp.tanh(c_new)
        out_ref[t] = h_new.astype(out_ref.dtype)
        return h_new, c_new

    h_fin, c_fin = jax.lax.fori_loop(
        0, tchunk, step, (h_scr[...], c_scr[...]), unroll=True)
    h_scr[...] = h_fin
    c_scr[...] = c_fin

    # Only write the resident final-state outputs on the last chunk.
    @pl.when(chunk == pl.num_programs(0) - 1)
    def _():
        hN_ref[...] = h_fin.astype(hN_ref.dtype)
        cN_ref[...] = c_fin.astype(cN_ref.dtype)


def run_lstm_recurrence(gx, whh_t, *, out_dtype=jnp.float32, max_chunk=16):
    """gx: (T, Bp, 4*Hp) precomputed input gates. whh_t: (Hp, 4*Hp).
    Returns (out (T, Bp, Hp), h_N (Bp, Hp), c_N (Bp, Hp))."""
    T, Bp, G = gx.shape
    Hp = whh_t.shape[0]
    assert G == 4 * Hp
    out_dtype = jnp.dtype(out_dtype)

    tchunk = _pick_chunk(T, max_chunk)
    nchunks = T // tchunk
    kern = functools.partial(_lstm_recurrence_kernel, tchunk=tchunk, hidden=Hp)

    nbytes = (2 * tchunk * Bp * 4 * Hp * gx.dtype.itemsize        # gx (double-buffered)
              + Hp * 4 * Hp * whh_t.dtype.itemsize                # whh (single-buffered)
              + 2 * tchunk * Bp * Hp * out_dtype.itemsize         # out (double-buffered)
              + 4 * Bp * Hp * 4)                                  # hN, cN, h/c scratch

    def _call(whh_spec):
        return pl.pallas_call(
            kern,
            out_shape=(jax.ShapeDtypeStruct((T, Bp, Hp), out_dtype),
                       jax.ShapeDtypeStruct((Bp, Hp), jnp.float32),
                       jax.ShapeDtypeStruct((Bp, Hp), jnp.float32)),
            grid_spec=pltpu.PrefetchScalarGridSpec(
                num_scalar_prefetch=0,
                grid=(nchunks,),
                in_specs=[pl.BlockSpec((tchunk, Bp, 4 * Hp), lambda c: (c, 0, 0)),
                          whh_spec],
                out_specs=[pl.BlockSpec((tchunk, Bp, Hp), lambda c: (c, 0, 0)),
                           pl.BlockSpec((Bp, Hp), lambda c: (0, 0)),
                           pl.BlockSpec((Bp, Hp), lambda c: (0, 0))],
                scratch_shapes=[pltpu.VMEM((Bp, Hp), jnp.float32),
                                pltpu.VMEM((Bp, Hp), jnp.float32)]),
            compiler_params=pltpu.CompilerParams(
                dimension_semantics=("arbitrary",),       # sequential recurrence
                vmem_limit_bytes=_vmem_limit(nbytes)),
            cost_estimate=pl.CostEstimate(
                flops=2 * T * Bp * Hp * 4 * Hp + 10 * T * Bp * Hp,
                transcendentals=5 * T * Bp * Hp,
                bytes_accessed=(T * Bp * 4 * Hp * gx.dtype.itemsize
                                + Hp * 4 * Hp * whh_t.dtype.itemsize
                                + T * Bp * Hp * out_dtype.itemsize)),
        )(gx, whh_t)

    try:
        # Constant-index weight block: single-buffer it to halve its VMEM footprint.
        return _call(pl.BlockSpec((Hp, 4 * Hp), lambda c: (0, 0),
                                  pipeline_mode=pl.Buffered(1)))
    except Exception:
        # TODO(synk): pipeline_mode=pl.Buffered(1) unsupported on this JAX build;
        # fall back to the default (double-buffered) weight block.
        return _call(pl.BlockSpec((Hp, 4 * Hp), lambda c: (0, 0)))


# ---------------------------------------------------------------------------
# Full model forward (eval mode: dropout = identity; hidden=None -> zeros)
# ---------------------------------------------------------------------------
def lstm_model_forward(prep, input_ids):
    """input_ids: int32 (B, T). Returns (logits (B,T,V), (h_n (L,B,H), c_n (L,B,H)))."""
    B, T = input_ids.shape
    Bp = _round_up(B, 8)
    H, Hp, V, Vp = prep["H"], prep["Hp"], prep["V"], prep["Vp"]
    cdt = prep["lstm"][0]["w_ih_t"].dtype

    # Embedding gather (plain-JAX glue), done directly in time-major order so no
    # (B,T,E) -> (T,B,E) transpose of the activation tensor is ever materialized.
    x = jnp.take(prep["emb"], input_ids.T, axis=0)           # (T, B, Ep)
    if Bp != B:
        x = jnp.pad(x, ((0, 0), (0, Bp - B), (0, 0)))
    x = x.astype(cdt)

    h_list, c_list = [], []
    for layer in prep["lstm"]:
        in_p = layer["w_ih_t"].shape[0]
        # 1) hoisted input projection: one big MXU-friendly matmul over all T*Bp rows
        gx = run_matmul_bias(x.reshape(T * Bp, in_p),
                             layer["w_ih_t"], layer["bias"],
                             out_dtype=jnp.float32)
        gx = gx.reshape(T, Bp, 4 * Hp)
        # 2) sequential recurrence: only h @ W_hh inside the time loop
        x, hN, cN = run_lstm_recurrence(gx, layer["w_hh_t"], out_dtype=cdt)
        h_list.append(hN[:B, :H])
        c_list.append(cN[:B, :H])

    # Classifier head on the (much smaller than logits) hidden output.
    out = jnp.transpose(x[:, :B, :], (1, 0, 2))              # (B, T, Hp)
    logits = run_matmul_bias(out.reshape(B * T, Hp),
                             prep["cls_w_t"], prep["cls_b"],
                             out_dtype=jnp.float32)
    logits = logits.reshape(B, T, Vp)[:, :, :V]
    hidden = (jnp.stack(h_list, axis=0), jnp.stack(c_list, axis=0))
    return logits, hidden


# ---------------------------------------------------------------------------
# Parameter init (mirrors module __init__, tie_weights=True) + padded/blocked prep
# ---------------------------------------------------------------------------
def init_params(key, vocab_size, embedding_dim, hidden_dim, num_layers):
    assert embedding_dim == hidden_dim  # tied weights
    r = 1.0 / math.sqrt(hidden_dim)
    keys = jax.random.split(key, 2 + 4 * num_layers)
    cls_w = jax.random.uniform(keys[0], (vocab_size, hidden_dim),
                               minval=-r, maxval=r, dtype=jnp.float32)
    params = {
        "emb": cls_w,                               # tied: embedding.weight = cls.weight
        "cls_w_t": cls_w.T,                         # (H, V)
        "cls_b": jnp.zeros((1, vocab_size), jnp.float32),
        "lstm": [],
    }
    for l in range(num_layers):
        in_dim = embedding_dim if l == 0 else hidden_dim
        k0, k1, k2, k3 = keys[2 + 4 * l: 6 + 4 * l]
        w_ih = jax.random.uniform(k0, (4 * hidden_dim, in_dim),
                                  minval=-r, maxval=r, dtype=jnp.float32)
        w_hh = jax.random.uniform(k1, (4 * hidden_dim, hidden_dim),
                                  minval=-r, maxval=r, dtype=jnp.float32)
        b_ih = jax.random.uniform(k2, (4 * hidden_dim,),
                                  minval=-r, maxval=r, dtype=jnp.float32)
        b_hh = jax.random.uniform(k3, (4 * hidden_dim,),
                                  minval=-r, maxval=r, dtype=jnp.float32)
        params["lstm"].append({
            "w_ih_t": w_ih.T,                        # (in_dim, 4H)
            "w_hh_t": w_hh.T,                        # (H, 4H)
            "bias": (b_ih + b_hh)[None, :],          # (1, 4H)
        })
    return params


def prepare_params(params, hidden_dim, dtype=jnp.float32):
    """Pad to lane/sublane-friendly sizes with per-gate padding (zero-padded gate
    columns are mathematically inert for the LSTM). dtype=jnp.bfloat16 halves weight
    VMEM/HBM traffic on v6e/v7x (accumulation stays f32 inside the kernels)."""
    H = hidden_dim
    Hp = _round_up(H, 128)
    V, E = params["emb"].shape
    Ep = _round_up(E, 128)
    Vp = _round_up(V, 128)
    prep = {
        "emb": jnp.pad(params["emb"], ((0, 0), (0, Ep - E))).astype(dtype),
        "cls_w_t": _pad2(params["cls_w_t"], Hp, Vp).astype(dtype),
        "cls_b": jnp.pad(params["cls_b"], ((0, 0), (0, Vp - V))).astype(jnp.float32),
        "H": H, "Hp": Hp, "V": V, "Vp": Vp,
        "lstm": [],
    }
    for layer in params["lstm"]:
        in_dim = layer["w_ih_t"].shape[0]
        in_p = _round_up(in_dim, 128)
        wih = layer["w_ih_t"].reshape(in_dim, 4, H)
        wih = jnp.pad(wih, ((0, in_p - in_dim), (0, 0), (0, Hp - H)))
        whh = layer["w_hh_t"].reshape(H, 4, H)
        whh = jnp.pad(whh, ((0, Hp - H), (0, 0), (0, Hp - H)))
        bias = layer["bias"].reshape(1, 4, H)
        bias = jnp.pad(bias, ((0, 0), (0, 0), (0, Hp - H)))
        prep["lstm"].append({
            "w_ih_t": wih.reshape(in_p, 4 * Hp).astype(dtype),
            "w_hh_t": whh.reshape(Hp, 4 * Hp).astype(dtype),
            "bias": bias.reshape(1, 4 * Hp).astype(jnp.float32),
        })
    return prep


# ---------------------------------------------------------------------------
# Pure-JAX reference (lax.scan LSTM) for the correctness check
# ---------------------------------------------------------------------------
def reference_forward(params, input_ids):
    B, T = input_ids.shape
    emb = jnp.take(params["emb"], input_ids, axis=0)
    x = jnp.transpose(emb, (1, 0, 2))
    h_stack, c_stack = [], []
    for layer in params["lstm"]:
        H = layer["w_hh_t"].shape[0]

        def step(carry, x_t, layer=layer, H=H):
            h, c = carry
            g = x_t @ layer["w_ih_t"] + h @ layer["w_hh_t"] + layer["bias"]
            i = jax.nn.sigmoid(g[:, :H]); f = jax.nn.sigmoid(g[:, H:2 * H])
            gg = jnp.tanh(g[:, 2 * H:3 * H]); o = jax.nn.sigmoid(g[:, 3 * H:])
            c = f * c + i * gg
            h = o * jnp.tanh(c)
            return (h, c), h

        init = (jnp.zeros((B, H), jnp.float32), jnp.zeros((B, H), jnp.float32))
        (h_n, c_n), x = jax.lax.scan(step, init, x)
        h_stack.append(h_n); c_stack.append(c_n)
    out = jnp.transpose(x, (1, 0, 2))
    logits = out @ params["cls_w_t"] + params["cls_b"]
    return logits, (jnp.stack(h_stack), jnp.stack(c_stack))


if __name__ == "__main__":
    vocab_size, embedding_dim, hidden_dim, num_layers = 64, 32, 32, 2
    batch, seq = 2, 8

    key = jax.random.PRNGKey(0)
    pkey, ikey = jax.random.split(key)
    params = init_params(pkey, vocab_size, embedding_dim, hidden_dim, num_layers)
    prep = prepare_params(params, hidden_dim, dtype=jnp.float32)  # bf16 supported too
    input_ids = jax.random.randint(ikey, (batch, seq), 0, vocab_size,
                                   dtype=jnp.int32)

    logits, (h_n, c_n) = lstm_model_forward(prep, input_ids)
    jax.block_until_ready((logits, h_n, c_n))

    ref_logits, (ref_h, ref_c) = reference_forward(params, input_ids)
    assert logits.shape == (batch, seq, vocab_size)
    assert h_n.shape == (num_layers, batch, hidden_dim)
    assert c_n.shape == (num_layers, batch, hidden_dim)
    # f32 everywhere -> tight tolerance (tightened from the previous 1e-2).
    assert jnp.allclose(logits, ref_logits, atol=2e-3, rtol=2e-3)
    assert jnp.allclose(h_n, ref_h, atol=2e-3, rtol=2e-3)
    assert jnp.allclose(c_n, ref_c, atol=2e-3, rtol=2e-3)

    print("KERNEL_OK")
</pallas_src>

<mosaic_0001>
module attributes {stable_mosaic.version = 11 : i64} {
  func.func @_matmul_bias_kernel(%arg0: i32, %arg1: i32, %arg2: i32, %arg3: memref<64x128xf32, #tpu.memory_space<vmem>>, %arg4: memref<128x512xf32, #tpu.memory_space<vmem>>, %arg5: memref<1x512xf32, #tpu.memory_space<vmem>>, %arg6: memref<64x512xf32, #tpu.memory_space<vmem>>, %arg7: memref<64x512xf32, #tpu.memory_space<vmem>>) attributes {dimension_semantics = [#tpu.dimension_semantics<parallel>, #tpu.dimension_semantics<parallel>, #tpu.dimension_semantics<arbitrary>], iteration_bounds = array<i64: 1, 1, 1>, scalar_prefetch = 0 : i64, scratch_operands = 1 : i64, tpu.core_type = #tpu.core_type<tc>, window_params = [{transform_indices = @transform_0, window_bounds = array<i64: 64, 128>}, {transform_indices = @transform_1, window_bounds = array<i64: 128, 512>}, {transform_indices = @transform_2, window_bounds = array<i64: 1, 512>}, {transform_indices = @transform_3, window_bounds = array<i64: 64, 512>}]} {
    %c0_i32 = arith.constant 0 : i32
    %0 = arith.cmpi eq, %arg2, %c0_i32 : i32
    %1 = arith.extui %0 : i1 to i32
    %c0_i32_0 = arith.constant 0 : i32
    %2 = arith.cmpi ne, %1, %c0_i32_0 : i32
    scf.if %2 {
      %cst_10 = arith.constant 0.000000e+00 : f32
      %12 = vector.broadcast %cst_10 : f32 to vector<64x512xf32>
      %c0_11 = arith.constant 0 : index
      %c0_12 = arith.constant 0 : index
      %13 = vector.load %arg7[%c0_11, %c0_12] : memref<64x512xf32, #tpu.memory_space<vmem>>, vector<64x512xf32>
      tpu.vector_store %arg7[%c0_11, %c0_12], %12 {strides = array<i32>} : memref<64x512xf32, #tpu.memory_space<vmem>>, vector<64x512xf32>,
    } else {
    }
    %c0 = arith.constant 0 : index
    %c0_1 = arith.constant 0 : index
    %3 = vector.load %arg7[%c0, %c0_1] : memref<64x512xf32, #tpu.memory_space<vmem>>, vector<64x512xf32>
    %c0_2 = arith.constant 0 : index
    %c0_3 = arith.constant 0 : index
    %4 = vector.load %arg3[%c0_2, %c0_3] : memref<64x128xf32, #tpu.memory_space<vmem>>, vector<64x128xf32>
    %c0_4 = arith.constant 0 : index
    %c0_5 = arith.constant 0 : index
    %5 = vector.load %arg4[%c0_4, %c0_5] : memref<128x512xf32, #tpu.memory_space<vmem>>, vector<128x512xf32>
    %cst = arith.constant dense<0.000000e+00> : vector<64x512xf32>
    %6 = tpu.matmul %4, %5, %cst {dimension_numbers = #tpu.dot_dimension_numbers<[1], [0], [0], [1], [0, 0, 1, 1], [], []>} : vector<64x128xf32>, vector<128x512xf32>, vector<64x512xf32> -> vector<64x512xf32>
    %7 = arith.addf %3, %6 : vector<64x512xf32>
    %c0_6 = arith.constant 0 : index
    %c0_7 = arith.constant 0 : index
    %8 = vector.load %arg7[%c0_6, %c0_7] : memref<64x512xf32, #tpu.memory_space<vmem>>, vector<64x512xf32>
    tpu.vector_store %arg7[%c0_6, %c0_7], %7 {strides = array<i32>} : memref<64x512xf32, #tpu.memory_space<vmem>>, vector<64x512xf32>,
    %c0_i32_8 = arith.constant 0 : i32
    %9 = arith.cmpi eq, %arg2, %c0_i32_8 : i32
    %10 = arith.extui %9 : i1 to i32
    %c0_i32_9 = arith.constant 0 : i32
    %11 = arith.cmpi ne, %10, %c0_i32_9 : i32
    scf.if %11 {
      %c0_10 = arith.constant 0 : index
      %c0_11 = arith.constant 0 : index
      %12 = vector.load %arg7[%c0_10, %c0_11] : memref<64x512xf32, #tpu.memory_space<vmem>>, vector<64x512xf32>
      %c0_12 = arith.constant 0 : index
      %c0_13 = arith.constant 0 : index
      %13 = vector.load %arg5[%c0_12, %c0_13] : memref<1x512xf32, #tpu.memory_space<vmem>>, vector<1x512xf32>
      %14 = vector.broadcast %13 : vector<1x512xf32> to vector<64x512xf32>
      %15 = arith.addf %12, %14 : vector<64x512xf32>
      %c0_14 = arith.constant 0 : index
      %c0_15 = arith.constant 0 : index
      %16 = vector.load %arg6[%c0_14, %c0_15] : memref<64x512xf32, #tpu.memory_space<vmem>>, vector<64x512xf32>
      tpu.vector_store %arg6[%c0_14, %c0_15], %15 {strides = array<i32>} : memref<64x512xf32, #tpu.memory_space<vmem>>, vector<64x512xf32>,
    } else {
    }
    return
  }
  func.func @transform_0(%arg0: i32, %arg1: i32, %arg2: i32) -> (i32, i32) {
    %c0_i32 = arith.constant 0 : i32
    return %arg0, %arg2 : i32, i32
  }
  func.func @transform_1(%arg0: i32, %arg1: i32, %arg2: i32) -> (i32, i32) {
    %c0_i32 = arith.constant 0 : i32
    return %arg2, %arg1 : i32, i32
  }
  func.func @transform_2(%arg0: i32, %arg1: i32, %arg2: i32) -> (i32, i32) {
    %c0_i32 = arith.constant 0 : i32
    %c0_i32_0 = arith.constant 0 : i32
    return %c0_i32, %arg1 : i32, i32
  }
  func.func @transform_3(%arg0: i32, %arg1: i32, %arg2: i32) -> (i32, i32) {
    %c0_i32 = arith.constant 0 : i32
    return %arg0, %arg1 : i32, i32
  }
}

</mosaic_0001>

<llo_original>
// kernel: tpu_custom_call.1
$region0: #{tpu_custom_call.1}
  #allocation0 [shape = 'u32[]', space=smem, size = 0x4, offset = 0x4, fixed_abs, tag = 'smem constant byte address 0x4 - core index']
  #allocation1 [shape = 'u32[72,128]{1,0:T(1,128)}', space=vmem, size = 0x9000, scoped, tag = 'internal scratch']
  #allocation2 [shape = 'f32[64,512]{1,0:T(8,128)}', space=vmem, size = 0x20000, scoped, tag = 'scratch operand']
  %s0 = inlined_call_operand.hbm [shape: f32[64,128], index: 0, kind: input, shape index: {}]
  %s1 = inlined_call_operand.hbm [shape: f32[128,512], index: 1, kind: input, shape index: {}]
  %s2 = inlined_call_operand.hbm [shape: f32[1,512], index: 2, kind: input, shape index: {}]
  %s3 = inlined_call_operand.hbm [shape: f32[64,512], index: 3, kind: output, shape index: {}]
  %s4 = sld [smem:[#allocation0]]
  $region42: #{tpu_custom_call.1} parent=0
    _
  %s6 = ssub.s32 1, %s4
  %s7 = scalar_select 0, %s6, %s4
  $region1: #{tpu_custom_call.1} parent=0
    #allocation3 [shape = 'u8[32768]{0}', space=vmem, size = 0x8000, scoped, tag = 'input window, operand 0, single buffered']
    #allocation4 [shape = 's32[1]{0}', space=sflag, size = 0x4, scoped, tag = 'scoped memory for tpu_custom_call.1']
    #allocation5 [shape = 's32[1]{0}', space=sflag, size = 0x4, scoped, tag = 'scoped memory for tpu_custom_call.1']
    #allocation6 [shape = 'u8[262144]{0}', space=vmem, size = 0x40000, scoped, tag = 'input window, operand 1, single buffered']
    #allocation7 [shape = 's32[1]{0}', space=sflag, size = 0x4, scoped, tag = 'scoped memory for tpu_custom_call.1']
    #allocation8 [shape = 'u8[2048]{0}', space=vmem, size = 0x800, scoped, tag = 'input window, operand 2, single buffered']
    #allocation9 [shape = 'u8[131072]{0}', space=vmem, size = 0x20000, scoped, tag = 'output window, operand 0, single buffered']
    %8 = vsyncpa [#allocation4], 0
    %9 = vsyncpa [#allocation7], 0
    %10 = vsyncpa [#allocation5], 0
    // Predicated region
    $region2: #{tpu_custom_call.1} parent=1 // pred_check
      _
    $region3: #{tpu_custom_call.1} parent=1 // pred_check_branch
      %12 = sbr.rel (0) target = $region5
    $region4: #{tpu_custom_call.1} parent=1 // pred_region
      %14 = vsyncadd [#allocation4], 0
      %s15 = sshll.u32 %s0, 4
      %s16 = int_to_ptr.hbm [resolvable:$true] %s15
      %s17 = sshll.u32 [#allocation3], 4
      %s18 = int_to_ptr.vmem [resolvable:$true] %s17
      %23 = dma.hbm_to_vmem [thread:$0]  %s16, 1024, %s18, [#allocation4], 128, 128, 8
    $region5: #{tpu_custom_call.1} parent=1 // pred_fallthru
      _
    // Predicated region
    $region6: #{tpu_custom_call.1} parent=1 // pred_check
      _
    $region7: #{tpu_custom_call.1} parent=1 // pred_check_branch
      %25 = sbr.rel (0) target = $region9
    $region8: #{tpu_custom_call.1} parent=1 // pred_region
      %27 = vsyncadd [#allocation7], 0
      %s28 = sshll.u32 %s1, 4
      %s29 = int_to_ptr.hbm [resolvable:$true] %s28
      %s30 = sshll.u32 [#allocation6], 4
      %s31 = int_to_ptr.vmem [resolvable:$true] %s30
      %36 = dma.hbm_to_vmem [thread:$0]  %s29, 8192, %s31, [#allocation7], 512, 512, 32
    $region9: #{tpu_custom_call.1} parent=1 // pred_fallthru
      _
    // Predicated region
    $region10: #{tpu_custom_call.1} parent=1 // pred_check
      _
    $region11: #{tpu_custom_call.1} parent=1 // pred_check_branch
      %38 = sbr.rel (0) target = $region13
    $region12: #{tpu_custom_call.1} parent=1 // pred_region
      %40 = vsyncadd [#allocation7], 0
      %s42 = sshll.u32 %s2, 4
      %s43 = int_to_ptr.hbm [resolvable:$true] %s42
      %s44 = sshll.u32 [#allocation8], 4
      %s45 = int_to_ptr.vmem [resolvable:$true] %s44
      %47 = dma.hbm_to_vmem [thread:$0]  %s43, 64, %s45, [#allocation7]
    $region13: #{tpu_custom_call.1} parent=1 // pred_fallthru
      _
    // Predicated region
    $region14: #{tpu_custom_call.1} parent=1 // pred_check
      _
    $region15: #{tpu_custom_call.1} parent=1 // pred_check_branch
      %49 = sbr.rel (0) target = $region17
    $region16: #{tpu_custom_call.1} parent=1 // pred_region
      %51 = dma.done [#allocation4], 1024
    $region17: #{tpu_custom_call.1} parent=1 // pred_fallthru
      _
    // Predicated region
    $region18: #{tpu_custom_call.1} parent=1 // pred_check
      _
    $region19: #{tpu_custom_call.1} parent=1 // pred_check_branch
      %53 = sbr.rel (0) target = $region21
    $region20: #{tpu_custom_call.1} parent=1 // pred_region
      %55 = dma.done [#allocation7], 8192
    $region21: #{tpu_custom_call.1} parent=1 // pred_fallthru
      _
    // Predicated region
    $region22: #{tpu_custom_call.1} parent=1 // pred_check
      _
    $region23: #{tpu_custom_call.1} parent=1 // pred_check_branch
      %57 = sbr.rel (0) target = $region25
    $region24: #{tpu_custom_call.1} parent=1 // pred_region
      %59 = dma.done [#allocation7], 64
    $region25: #{tpu_custom_call.1} parent=1 // pred_fallthru
      _
    %p60 = scmp.eq.s32.totalorder 0, 0
    // Predicated region
    $region26: #{tpu_custom_call.1} parent=1 // pred_check
      %p61 = pneg %p60
    $region27: #{tpu_custom_call.1} parent=1 // pred_check_branch
      %63 = sbr.rel (%p61) target = $region29
    $region28: #{tpu_custom_call.1} parent=1 // pred_region
      %64 = vst [vmem:[#allocation2] sm:$0xff] 0.0
      %65 = vst [vmem:[#allocation2 + $0x8] sm:$0xff] 0.0
      %66 = vst [vmem:[#allocation2 + $0x10] sm:$0xff] 0.0
      %67 = vst [vmem:[#allocation2 + $0x18] sm:$0xff] 0.0
      %68 = vst [vmem:[#allocation2 + $0x20] sm:$0xff] 0.0
      %69 = vst [vmem:[#allocation2 + $0x28] sm:$0xff] 0.0
      %70 = vst [vmem:[#allocation2 + $0x30] sm:$0xff] 0.0
      %71 = vst [vmem:[#allocation2 + $0x38] sm:$0xff] 0.0
      %72 = vst [vmem:[#allocation2 + $0x40] sm:$0xff] 0.0
      %73 = vst [vmem:[#allocation2 + $0x48] sm:$0xff] 0.0
      %74 = vst [vmem:[#allocation2 + $0x50] sm:$0xff] 0.0
      %75 = vst [vmem:[#allocation2 + $0x58] sm:$0xff] 0.0
      %76 = vst [vmem:[#allocation2 + $0x60] sm:$0xff] 0.0
      %77 = vst [vmem:[#allocation2 + $0x68] sm:$0xff] 0.0
      %78 = vst [vmem:[#allocation2 + $0x70] sm:$0xff] 0.0
      %79 = vst [vmem:[#allocation2 + $0x78] sm:$0xff] 0.0
      %80 = vst [vmem:[#allocation2 + $0x80] sm:$0xff] 0.0
      %81 = vst [vmem:[#allocation2 + $0x88] sm:$0xff] 0.0
      %82 = vst [vmem:[#allocation2 + $0x90] sm:$0xff] 0.0
      %83 = vst [vmem:[#allocation2 + $0x98] sm:$0xff] 0.0
      %84 = vst [vmem:[#allocation2 + $0xa0] sm:$0xff] 0.0
      %85 = vst [vmem:[#allocation2 + $0xa8] sm:$0xff] 0.0
      %86 = vst [vmem:[#allocation2 + $0xb0] sm:$0xff] 0.0
      %87 = vst [vmem:[#allocation2 + $0xb8] sm:$0xff] 0.0
      %88 = vst [vmem:[#allocation2 + $0xc0] sm:$0xff] 0.0
      %89 = vst [vmem:[#allocation2 + $0xc8] sm:$0xff] 0.0
      %90 = vst [vmem:[#allocation2 + $0xd0] sm:$0xff] 0.0
      %91 = vst [vmem:[#allocation2 + $0xd8] sm:$0xff] 0.0
      %92 = vst [vmem:[#allocation2 + $0xe0] sm:$0xff] 0.0
      %93 = vst [vmem:[#allocation2 + $0xe8] sm:$0xff] 0.0
      %94 = vst [vmem:[#allocation2 + $0xf0] sm:$0xff] 0.0
      %95 = vst [vmem:[#allocation2 + $0xf8] sm:$0xff] 0.0
    $region29: #{tpu_custom_call.1} parent=1 // pred_fallthru
      _
    %v96 = vld [vmem:[#allocation2] sm:$0xff]
    %v97 = vld [vmem:[#allocation2 + $0x8] sm:$0xff]
    %v98 = vld [vmem:[#allocation2 + $0x10] sm:$0xff]
    %v99 = vld [vmem:[#allocation2 + $0x18] sm:$0xff]
    %v100 = vld [vmem:[#allocation2 + $0x20] sm:$0xff]
    %v101 = vld [vmem:[#allocation2 + $0x28] sm:$0xff]
    %v102 = vld [vmem:[#allocation2 + $0x30] sm:$0xff]
    %v103 = vld [vmem:[#allocation2 + $0x38] sm:$0xff]
    %v104 = vld [vmem:[#allocation2 + $0x40] sm:$0xff]
    %v105 = vld [vmem:[#allocation2 + $0x48] sm:$0xff]
    %v106 = vld [vmem:[#allocation2 + $0x50] sm:$0xff]
    %v107 = vld [vmem:[#allocation2 + $0x58] sm:$0xff]
    %v108 = vld [vmem:[#allocation2 + $0x60] sm:$0xff]
    %v109 = vld [vmem:[#allocation2 + $0x68] sm:$0xff]
    %v110 = vld [vmem:[#allocation2 + $0x70] sm:$0xff]
    %v111 = vld [vmem:[#allocation2 + $0x78] sm:$0xff]
    %v112 = vld [vmem:[#allocation2 + $0x80] sm:$0xff]
    %v113 = vld [vmem:[#allocation2 + $0x88] sm:$0xff]
    %v114 = vld [vmem:[#allocation2 + $0x90] sm:$0xff]
    %v115 = vld [vmem:[#allocation2 + $0x98] sm:$0xff]
    %v116 = vld [vmem:[#allocation2 + $0xa0] sm:$0xff]
    %v117 = vld [vmem:[#allocation2 + $0xa8] sm:$0xff]
    %v118 = vld [vmem:[#allocation2 + $0xb0] sm:$0xff]
    %v119 = vld [vmem:[#allocation2 + $0xb8] sm:$0xff]
    %v120 = vld [vmem:[#allocation2 + $0xc0] sm:$0xff]
    %v121 = vld [vmem:[#allocation2 + $0xc8] sm:$0xff]
    %v122 = vld [vmem:[#allocation2 + $0xd0] sm:$0xff]
    %v123 = vld [vmem:[#allocation2 + $0xd8] sm:$0xff]
    %v124 = vld [vmem:[#allocation2 + $0xe0] sm:$0xff]
    %v125 = vld [vmem:[#allocation2 + $0xe8] sm:$0xff]
    %v126 = vld [vmem:[#allocation2 + $0xf0] sm:$0xff]
    %v127 = vld [vmem:[#allocation2 + $0xf8] sm:$0xff]
    %v128 = vld [vmem:[#allocation3] sm:$0xff]
    %v129 = vld [vmem:[#allocation3 + $0x8] sm:$0xff]
    %v130 = vld [vmem:[#allocation3 + $0x10] sm:$0xff]
    %v131 = vld [vmem:[#allocation3 + $0x18] sm:$0xff]
    %v132 = vld [vmem:[#allocation3 + $0x20] sm:$0xff]
    %v133 = vld [vmem:[#allocation3 + $0x28] sm:$0xff]
    %v134 = vld [vmem:[#allocation3 + $0x30] sm:$0xff]
    %v135 = vld [vmem:[#allocation3 + $0x38] sm:$0xff]
    %v136 = vld [vmem:[#allocation6] sm:$0xff]
    %v137 = vld [vmem:[#allocation6 + $0x8] sm:$0xff]
    %v138 = vld [vmem:[#allocation6 + $0x10] sm:$0xff]
    %v139 = vld [vmem:[#allocation6 + $0x18] sm:$0xff]
    %v140 = vld [vmem:[#allocation6 + $0x20] sm:$0xff]
    %v141 = vld [vmem:[#allocation6 + $0x28] sm:$0xff]
    %v142 = vld [vmem:[#allocation6 + $0x30] sm:$0xff]
    %v143 = vld [vmem:[#allocation6 + $0x38] sm:$0xff]
    %v144 = vld [vmem:[#allocation6 + $0x40] sm:$0xff]
    %v145 = vld [vmem:[#allocation6 + $0x48] sm:$0xff]
    %v146 = vld [vmem:[#allocation6 + $0x50] sm:$0xff]
    %v147 = vld [vmem:[#allocation6 + $0x58] sm:$0xff]
    %v148 = vld [vmem:[#allocation6 + $0x60] sm:$0xff]
    %v149 = vld [vmem:[#allocation6 + $0x68] sm:$0xff]
    %v150 = vld [vmem:[#allocation6 + $0x70] sm:$0xff]
    %v151 = vld [vmem:[#allocation6 + $0x78] sm:$0xff]
    %v152 = vld [vmem:[#allocation6 + $0x80] sm:$0xff]
    %v153 = vld [vmem:[#allocation6 + $0x88] sm:$0xff]
    %v154 = vld [vmem:[#allocation6 + $0x90] sm:$0xff]
    %v155 = vld [vmem:[#allocation6 + $0x98] sm:$0xff]
    %v156 = vld [vmem:[#allocation6 + $0xa0] sm:$0xff]
    %v157 = vld [vmem:[#allocation6 + $0xa8] sm:$0xff]
    %v158 = vld [vmem:[#allocation6 + $0xb0] sm:$0xff]
    %v159 = vld [vmem:[#allocation6 + $0xb8] sm:$0xff]
    %v160 = vld [vmem:[#allocation6 + $0xc0] sm:$0xff]
    %v161 = vld [vmem:[#allocation6 + $0xc8] sm:$0xff]
    %v162 = vld [vmem:[#allocation6 + $0xd0] sm:$0xff]
    %v163 = vld [vmem:[#allocation6 + $0xd8] sm:$0xff]
    %v164 = vld [vmem:[#allocation6 + $0xe0] sm:$0xff]
    %v165 = vld [vmem:[#allocation6 + $0xe8] sm:$0xff]
    %v166 = vld [vmem:[#allocation6 + $0xf0] sm:$0xff]
    %v167 = vld [vmem:[#allocation6 + $0xf8] sm:$0xff]
    %v168 = vld [vmem:[#allocation6 + $0x100] sm:$0xff]
    %v169 = vld [vmem:[#allocation6 + $0x108] sm:$0xff]
    %v170 = vld [vmem:[#allocation6 + $0x110] sm:$0xff]
    %v171 = vld [vmem:[#allocation6 + $0x118] sm:$0xff]
    %v172 = vld [vmem:[#allocation6 + $0x120] sm:$0xff]
    %v173 = vld [vmem:[#allocation6 + $0x128] sm:$0xff]
    %v174 = vld [vmem:[#allocation6 + $0x130] sm:$0xff]
    %v175 = vld [vmem:[#allocation6 + $0x138] sm:$0xff]
    %v176 = vld [vmem:[#allocation6 + $0x140] sm:$0xff]
    %v177 = vld [vmem:[#allocation6 + $0x148] sm:$0xff]
    %v178 = vld [vmem:[#allocation6 + $0x150] sm:$0xff]
    %v179 = vld [vmem:[#allocation6 + $0x158] sm:$0xff]
    %v180 = vld [vmem:[#allocation6 + $0x160] sm:$0xff]
    %v181 = vld [vmem:[#allocation6 + $0x168] sm:$0xff]
    %v182 = vld [vmem:[#allocation6 + $0x170] sm:$0xff]
    %v183 = vld [vmem:[#allocation6 + $0x178] sm:$0xff]
    %v184 = vld [vmem:[#allocation6 + $0x180] sm:$0xff]
    %v185 = vld [vmem:[#allocation6 + $0x188] sm:$0xff]
    %v186 = vld [vmem:[#allocation6 + $0x190] sm:$0xff]
    %v187 = vld [vmem:[#allocation6 + $0x198] sm:$0xff]
    %v188 = vld [vmem:[#allocation6 + $0x1a0] sm:$0xff]
    %v189 = vld [vmem:[#allocation6 + $0x1a8] sm:$0xff]
    %v190 = vld [vmem:[#allocation6 + $0x1b0] sm:$0xff]
    %v191 = vld [vmem:[#allocation6 + $0x1b8] sm:$0xff]
    %v192 = vld [vmem:[#allocation6 + $0x1c0] sm:$0xff]
    %v193 = vld [vmem:[#allocation6 + $0x1c8] sm:$0xff]
    %v194 = vld [vmem:[#allocation6 + $0x1d0] sm:$0xff]
    %v195 = vld [vmem:[#allocation6 + $0x1d8] sm:$0xff]
    %v196 = vld [vmem:[#allocation6 + $0x1e0] sm:$0xff]
    %v197 = vld [vmem:[#allocation6 + $0x1e8] sm:$0xff]
    %v198 = vld [vmem:[#allocation6 + $0x1f0] sm:$0xff]
    %v199 = vld [vmem:[#allocation6 + $0x1f8] sm:$0xff]
    %200 = vmatpush.msra.mxu0 %v196
    %201 = vmatpush.msra.mxu0 %v192
    %202 = vmatpush.msra.mxu0 %v188
    %203 = vmatpush.msra.mxu0 %v184
    %204 = vmatpush.msra.mxu0 %v180
    %205 = vmatpush.msra.mxu0 %v176
    %206 = vmatpush.msra.mxu0 %v172
    %207 = vmatpush.msra.mxu0 %v168
    %208 = vmatpush.msra.mxu0 %v164
    %209 = vmatpush.msra.mxu0 %v160
    %210 = vmatpush.msra.mxu0 %v156
    %211 = vmatpush.msra.mxu0 %v152
    %212 = vmatpush.msra.mxu0 %v148
    %213 = vmatpush.msra.mxu0 %v144
    %214 = vmatpush.msra.mxu0 %v140
    %215 = vmatpush.msra.mxu0 %v136
    %216 = vmatmul.f32.gmra.mxu0 %v128
    %v217 = vpop.f32.mrf.mxu0
    %v218 = vadd.f32 0.0, %v217
    %219 = vmatmul.f32.gmra.mxu0 %v129
    %v220 = vpop.f32.mrf.mxu0
    %v221 = vadd.f32 0.0, %v220
    %222 = vmatmul.f32.gmra.mxu0 %v130
    %v223 = vpop.f32.mrf.mxu0
    %v224 = vadd.f32 0.0, %v223
    %225 = vmatmul.f32.gmra.mxu0 %v131
    %v226 = vpop.f32.mrf.mxu0
    %v227 = vadd.f32 0.0, %v226
    %228 = vmatmul.f32.gmra.mxu0 %v132
    %v229 = vpop.f32.mrf.mxu0
    %v230 = vadd.f32 0.0, %v229
    %231 = vmatmul.f32.gmra.mxu0 %v133
    %v232 = vpop.f32.mrf.mxu0
    %v233 = vadd.f32 0.0, %v232
    %234 = vmatmul.f32.gmra.mxu0 %v134
    %v235 = vpop.f32.mrf.mxu0
    %v236 = vadd.f32 0.0, %v235
    %237 = vmatmul.f32.gmra.mxu0 %v135
    %v238 = vpop.f32.mrf.mxu0
    %v239 = vadd.f32 0.0, %v238
    %240 = vdwg.mxu0
    %241 = vmatpush.msra.mxu0 %v197
    %242 = vmatpush.msra.mxu0 %v193
    %243 = vmatpush.msra.mxu0 %v189
    %244 = vmatpush.msra.mxu0 %v185
    %245 = vmatpush.msra.mxu0 %v181
    %246 = vmatpush.msra.mxu0 %v177
    %247 = vmatpush.msra.mxu0 %v173
    %248 = vmatpush.msra.mxu0 %v169
    %249 = vmatpush.msra.mxu0 %v165
    %250 = vmatpush.msra.mxu0 %v161
    %251 = vmatpush.msra.mxu0 %v157
    %252 = vmatpush.msra.mxu0 %v153
    %253 = vmatpush.msra.mxu0 %v149
    %254 = vmatpush.msra.mxu0 %v145
    %255 = vmatpush.msra.mxu0 %v141
    %256 = vmatpush.msra.mxu0 %v137
    %257 = vmatmul.f32.gmra.mxu0 %v128
    %v258 = vpop.f32.mrf.mxu0
    %v259 = vadd.f32 0.0, %v258
    %260 = vmatmul.f32.gmra.mxu0 %v129
    %v261 = vpop.f32.mrf.mxu0
    %v262 = vadd.f32 0.0, %v261
    %263 = vmatmul.f32.gmra.mxu0 %v130
    %v264 = vpop.f32.mrf.mxu0
    %v265 = vadd.f32 0.0, %v264
    %266 = vmatmul.f32.gmra.mxu0 %v131
    %v267 = vpop.f32.mrf.mxu0
    %v268 = vadd.f32 0.0, %v267
    %269 = vmatmul.f32.gmra.mxu0 %v132
    %v270 = vpop.f32.mrf.mxu0
    %v271 = vadd.f32 0.0, %v270
    %272 = vmatmul.f32.gmra.mxu0 %v133
    %v273 = vpop.f32.mrf.mxu0
    %v274 = vadd.f32 0.0, %v273
    %275 = vmatmul.f32.gmra.mxu0 %v134
    %v276 = vpop.f32.mrf.mxu0
    %v277 = vadd.f32 0.0, %v276
    %278 = vmatmul.f32.gmra.mxu0 %v135
    %v279 = vpop.f32.mrf.mxu0
    %v280 = vadd.f32 0.0, %v279
    %281 = vdwg.mxu0
    %282 = vmatpush.msra.mxu0 %v198
    %283 = vmatpush.msra.mxu0 %v194
    %284 = vmatpush.msra.mxu0 %v190
    %285 = vmatpush.msra.mxu0 %v186
    %286 = vmatpush.msra.mxu0 %v182
    %287 = vmatpush.msra.mxu0 %v178
    %288 = vmatpush.msra.mxu0 %v174
    %289 = vmatpush.msra.mxu0 %v170
    %290 = vmatpush.msra.mxu0 %v166
    %291 = vmatpush.msra.mxu0 %v162
    %292 = vmatpush.msra.mxu0 %v158
    %293 = vmatpush.msra.mxu0 %v154
    %294 = vmatpush.msra.mxu0 %v150
    %295 = vmatpush.msra.mxu0 %v146
    %296 = vmatpush.msra.mxu0 %v142
    %297 = vmatpush.msra.mxu0 %v138
    %298 = vmatmul.f32.gmra.mxu0 %v128
    %v299 = vpop.f32.mrf.mxu0
    %v300 = vadd.f32 0.0, %v299
    %301 = vmatmul.f32.gmra.mxu0 %v129
    %v302 = vpop.f32.mrf.mxu0
    %v303 = vadd.f32 0.0, %v302
    %304 = vmatmul.f32.gmra.mxu0 %v130
    %v305 = vpop.f32.mrf.mxu0
    %v306 = vadd.f32 0.0, %v305
    %307 = vmatmul.f32.gmra.mxu0 %v131
    %v308 = vpop.f32.mrf.mxu0
    %v309 = vadd.f32 0.0, %v308
    %310 = vmatmul.f32.gmra.mxu0 %v132
    %v311 = vpop.f32.mrf.mxu0
    %v312 = vadd.f32 0.0, %v311
    %313 = vmatmul.f32.gmra.mxu0 %v133
    %v314 = vpop.f32.mrf.mxu0
    %v315 = vadd.f32 0.0, %v314
    %316 = vmatmul.f32.gmra.mxu0 %v134
    %v317 = vpop.f32.mrf.mxu0
    %v318 = vadd.f32 0.0, %v317
    %319 = vmatmul.f32.gmra.mxu0 %v135
    %v320 = vpop.f32.mrf.mxu0
    %v321 = vadd.f32 0.0, %v320
    %322 = vdwg.mxu0
    %323 = vmatpush.msra.mxu0 %v199
    %324 = vmatpush.msra.mxu0 %v195
    %325 = vmatpush.msra.mxu0 %v191
    %326 = vmatpush.msra.mxu0 %v187
    %327 = vmatpush.msra.mxu0 %v183
    %328 = vmatpush.msra.mxu0 %v179
    %329 = vmatpush.msra.mxu0 %v175
    %330 = vmatpush.msra.mxu0 %v171
    %331 = vmatpush.msra.mxu0 %v167
    %332 = vmatpush.msra.mxu0 %v163
    %333 = vmatpush.msra.mxu0 %v159
    %334 = vmatpush.msra.mxu0 %v155
    %335 = vmatpush.msra.mxu0 %v151
    %336 = vmatpush.msra.mxu0 %v147
    %337 = vmatpush.msra.mxu0 %v143
    %338 = vmatpush.msra.mxu0 %v139
    %339 = vmatmul.f32.gmra.mxu0 %v128
    %v340 = vpop.f32.mrf.mxu0
    %v341 = vadd.f32 0.0, %v340
    %342 = vmatmul.f32.gmra.mxu0 %v129
    %v343 = vpop.f32.mrf.mxu0
    %v344 = vadd.f32 0.0, %v343
    %345 = vmatmul.f32.gmra.mxu0 %v130
    %v346 = vpop.f32.mrf.mxu0
    %v347 = vadd.f32 0.0, %v346
    %348 = vmatmul.f32.gmra.mxu0 %v131
    %v349 = vpop.f32.mrf.mxu0
    %v350 = vadd.f32 0.0, %v349
    %351 = vmatmul.f32.gmra.mxu0 %v132
    %v352 = vpop.f32.mrf.mxu0
    %v353 = vadd.f32 0.0, %v352
    %354 = vmatmul.f32.gmra.mxu0 %v133
    %v355 = vpop.f32.mrf.mxu0
    %v356 = vadd.f32 0.0, %v355
    %357 = vmatmul.f32.gmra.mxu0 %v134
    %v358 = vpop.f32.mrf.mxu0
    %v359 = vadd.f32 0.0, %v358
    %360 = vmatmul.f32.gmra.mxu0 %v135
    %v361 = vpop.f32.mrf.mxu0
    %v362 = vadd.f32 0.0, %v361
    %363 = vdwg.mxu0
    %v364 = vadd.f32 %v96, %v218
    %v365 = vadd.f32 %v97, %v259
    %v366 = vadd.f32 %v98, %v300
    %v367 = vadd.f32 %v99, %v341
    %v368 = vadd.f32 %v100, %v221
    %v369 = vadd.f32 %v101, %v262
    %v370 = vadd.f32 %v102, %v303
    %v371 = vadd.f32 %v103, %v344
    %v372 = vadd.f32 %v104, %v224
    %v373 = vadd.f32 %v105, %v265
    %v374 = vadd.f32 %v106, %v306
    %v375 = vadd.f32 %v107, %v347
    %v376 = vadd.f32 %v108, %v227
    %v377 = vadd.f32 %v109, %v268
    %v378 = vadd.f32 %v110, %v309
    %v379 = vadd.f32 %v111, %v350
    %v380 = vadd.f32 %v112, %v230
    %v381 = vadd.f32 %v113, %v271
    %v382 = vadd.f32 %v114, %v312
    %v383 = vadd.f32 %v115, %v353
    %v384 = vadd.f32 %v116, %v233
    %v385 = vadd.f32 %v117, %v274
    %v386 = vadd.f32 %v118, %v315
    %v387 = vadd.f32 %v119, %v356
    %v388 = vadd.f32 %v120, %v236
    %v389 = vadd.f32 %v121, %v277
    %v390 = vadd.f32 %v122, %v318
    %v391 = vadd.f32 %v123, %v359
    %v392 = vadd.f32 %v124, %v239
    %v393 = vadd.f32 %v125, %v280
    %v394 = vadd.f32 %v126, %v321
    %v395 = vadd.f32 %v127, %v362
    %396 = vst [vmem:[#allocation2] sm:$0xff] %v364
    %397 = vst [vmem:[#allocation2 + $0x8] sm:$0xff] %v365
    %398 = vst [vmem:[#allocation2 + $0x10] sm:$0xff] %v366
    %399 = vst [vmem:[#allocation2 + $0x18] sm:$0xff] %v367
    %400 = vst [vmem:[#allocation2 + $0x20] sm:$0xff] %v368
    %401 = vst [vmem:[#allocation2 + $0x28] sm:$0xff] %v369
    %402 = vst [vmem:[#allocation2 + $0x30] sm:$0xff] %v370
    %403 = vst [vmem:[#allocation2 + $0x38] sm:$0xff] %v371
    %404 = vst [vmem:[#allocation2 + $0x40] sm:$0xff] %v372
    %405 = vst [vmem:[#allocation2 + $0x48] sm:$0xff] %v373
    %406 = vst [vmem:[#allocation2 + $0x50] sm:$0xff] %v374
    %407 = vst [vmem:[#allocation2 + $0x58] sm:$0xff] %v375
    %408 = vst [vmem:[#allocation2 + $0x60] sm:$0xff] %v376
    %409 = vst [vmem:[#allocation2 + $0x68] sm:$0xff] %v377
    %410 = vst [vmem:[#allocation2 + $0x70] sm:$0xff] %v378
    %411 = vst [vmem:[#allocation2 + $0x78] sm:$0xff] %v379
    %412 = vst [vmem:[#allocation2 + $0x80] sm:$0xff] %v380
    %413 = vst [vmem:[#allocation2 + $0x88] sm:$0xff] %v381
    %414 = vst [vmem:[#allocation2 + $0x90] sm:$0xff] %v382
    %415 = vst [vmem:[#allocation2 + $0x98] sm:$0xff] %v383
    %416 = vst [vmem:[#allocation2 + $0xa0] sm:$0xff] %v384
    %417 = vst [vmem:[#allocation2 + $0xa8] sm:$0xff] %v385
    %418 = vst [vmem:[#allocation2 + $0xb0] sm:$0xff] %v386
    %419 = vst [vmem:[#allocation2 + $0xb8] sm:$0xff] %v387
    %420 = vst [vmem:[#allocation2 + $0xc0] sm:$0xff] %v388
    %421 = vst [vmem:[#allocation2 + $0xc8] sm:$0xff] %v389
    %422 = vst [vmem:[#allocation2 + $0xd0] sm:$0xff] %v390
    %423 = vst [vmem:[#allocation2 + $0xd8] sm:$0xff] %v391
    %424 = vst [vmem:[#allocation2 + $0xe0] sm:$0xff] %v392
    %425 = vst [vmem:[#allocation2 + $0xe8] sm:$0xff] %v393
    %426 = vst [vmem:[#allocation2 + $0xf0] sm:$0xff] %v394
    %427 = vst [vmem:[#allocation2 + $0xf8] sm:$0xff] %v395
    // Predicated region
    $region30: #{tpu_custom_call.1} parent=1 // pred_check
      %p428 = pneg %p60
    $region31: #{tpu_custom_call.1} parent=1 // pred_check_branch
      %430 = sbr.rel (%p428) target = $region33
    $region32: #{tpu_custom_call.1} parent=1 // pred_region
      %v431 = vld [vmem:[#allocation2] sm:$0xff]
      %v432 = vld [vmem:[#allocation2 + $0x8] sm:$0xff]
      %v433 = vld [vmem:[#allocation2 + $0x10] sm:$0xff]
      %v434 = vld [vmem:[#allocation2 + $0x18] sm:$0xff]
      %v435 = vld [vmem:[#allocation2 + $0x20] sm:$0xff]
      %v436 = vld [vmem:[#allocation2 + $0x28] sm:$0xff]
      %v437 = vld [vmem:[#allocation2 + $0x30] sm:$0xff]
      %v438 = vld [vmem:[#allocation2 + $0x38] sm:$0xff]
      %v439 = vld [vmem:[#allocation2 + $0x40] sm:$0xff]
      %v440 = vld [vmem:[#allocation2 + $0x48] sm:$0xff]
      %v441 = vld [vmem:[#allocation2 + $0x50] sm:$0xff]
      %v442 = vld [vmem:[#allocation2 + $0x58] sm:$0xff]
      %v443 = vld [vmem:[#allocation2 + $0x60] sm:$0xff]
      %v444 = vld [vmem:[#allocation2 + $0x68] sm:$0xff]
      %v445 = vld [vmem:[#allocation2 + $0x70] sm:$0xff]
      %v446 = vld [vmem:[#allocation2 + $0x78] sm:$0xff]
      %v447 = vld [vmem:[#allocation2 + $0x80] sm:$0xff]
      %v448 = vld [vmem:[#allocation2 + $0x88] sm:$0xff]
      %v449 = vld [vmem:[#allocation2 + $0x90] sm:$0xff]
      %v450 = vld [vmem:[#allocation2 + $0x98] sm:$0xff]
      %v451 = vld [vmem:[#allocation2 + $0xa0] sm:$0xff]
      %v452 = vld [vmem:[#allocation2 + $0xa8] sm:$0xff]
      %v453 = vld [vmem:[#allocation2 + $0xb0] sm:$0xff]
      %v454 = vld [vmem:[#allocation2 + $0xb8] sm:$0xff]
      %v455 = vld [vmem:[#allocation2 + $0xc0] sm:$0xff]
      %v456 = vld [vmem:[#allocation2 + $0xc8] sm:$0xff]
      %v457 = vld [vmem:[#allocation2 + $0xd0] sm:$0xff]
      %v458 = vld [vmem:[#allocation2 + $0xd8] sm:$0xff]
      %v459 = vld [vmem:[#allocation2 + $0xe0] sm:$0xff]
      %v460 = vld [vmem:[#allocation2 + $0xe8] sm:$0xff]
      %v461 = vld [vmem:[#allocation2 + $0xf0] sm:$0xff]
      %v462 = vld [vmem:[#allocation2 + $0xf8] sm:$0xff]
      %v463 = vld [vmem:[#allocation8] sm:$0xf]
      %v465 = vperm.slane %v463, 0
      %v466 = vperm.slane %v463, 1
      %v467 = vperm.slane %v463, 2
      %v468 = vperm.slane %v463, 3
      %v473 = vadd.f32 %v431, %v465
      %v474 = vadd.f32 %v432, %v466
      %v475 = vadd.f32 %v433, %v467
      %v476 = vadd.f32 %v434, %v468
      %v477 = vadd.f32 %v435, %v465
      %v478 = vadd.f32 %v436, %v466
      %v479 = vadd.f32 %v437, %v467
      %v480 = vadd.f32 %v438, %v468
      %v481 = vadd.f32 %v439, %v465
      %v482 = vadd.f32 %v440, %v466
      %v483 = vadd.f32 %v441, %v467
      %v484 = vadd.f32 %v442, %v468
      %v485 = vadd.f32 %v443, %v465
      %v486 = vadd.f32 %v444, %v466
      %v487 = vadd.f32 %v445, %v467
      %v488 = vadd.f32 %v446, %v468
      %v489 = vadd.f32 %v447, %v465
      %v490 = vadd.f32 %v448, %v466
      %v491 = vadd.f32 %v449, %v467
      %v492 = vadd.f32 %v450, %v468
      %v493 = vadd.f32 %v451, %v465
      %v494 = vadd.f32 %v452, %v466
      %v495 = vadd.f32 %v453, %v467
      %v496 = vadd.f32 %v454, %v468
      %v497 = vadd.f32 %v455, %v465
      %v498 = vadd.f32 %v456, %v466
      %v499 = vadd.f32 %v457, %v467
      %v500 = vadd.f32 %v458, %v468
      %v501 = vadd.f32 %v459, %v465
      %v502 = vadd.f32 %v460, %v466
      %v503 = vadd.f32 %v461, %v467
      %v504 = vadd.f32 %v462, %v468
      %505 = vst [vmem:[#allocation9] sm:$0xff] %v473
      %506 = vst [vmem:[#allocation9 + $0x8] sm:$0xff] %v474
      %507 = vst [vmem:[#allocation9 + $0x10] sm:$0xff] %v475
      %508 = vst [vmem:[#allocation9 + $0x18] sm:$0xff] %v476
      %509 = vst [vmem:[#allocation9 + $0x20] sm:$0xff] %v477
      %510 = vst [vmem:[#allocation9 + $0x28] sm:$0xff] %v478
      %511 = vst [vmem:[#allocation9 + $0x30] sm:$0xff] %v479
      %512 = vst [vmem:[#allocation9 + $0x38] sm:$0xff] %v480
      %513 = vst [vmem:[#allocation9 + $0x40] sm:$0xff] %v481
      %514 = vst [vmem:[#allocation9 + $0x48] sm:$0xff] %v482
      %515 = vst [vmem:[#allocation9 + $0x50] sm:$0xff] %v483
      %516 = vst [vmem:[#allocation9 + $0x58] sm:$0xff] %v484
      %517 = vst [vmem:[#allocation9 + $0x60] sm:$0xff] %v485
      %518 = vst [vmem:[#allocation9 + $0x68] sm:$0xff] %v486
      %519 = vst [vmem:[#allocation9 + $0x70] sm:$0xff] %v487
      %520 = vst [vmem:[#allocation9 + $0x78] sm:$0xff] %v488
      %521 = vst [vmem:[#allocation9 + $0x80] sm:$0xff] %v489
      %522 = vst [vmem:[#allocation9 + $0x88] sm:$0xff] %v490
      %523 = vst [vmem:[#allocation9 + $0x90] sm:$0xff] %v491
      %524 = vst [vmem:[#allocation9 + $0x98] sm:$0xff] %v492
      %525 = vst [vmem:[#allocation9 + $0xa0] sm:$0xff] %v493
      %526 = vst [vmem:[#allocation9 + $0xa8] sm:$0xff] %v494
      %527 = vst [vmem:[#allocation9 + $0xb0] sm:$0xff] %v495
      %528 = vst [vmem:[#allocation9 + $0xb8] sm:$0xff] %v496
      %529 = vst [vmem:[#allocation9 + $0xc0] sm:$0xff] %v497
      %530 = vst [vmem:[#allocation9 + $0xc8] sm:$0xff] %v498
      %531 = vst [vmem:[#allocation9 + $0xd0] sm:$0xff] %v499
      %532 = vst [vmem:[#allocation9 + $0xd8] sm:$0xff] %v500
      %533 = vst [vmem:[#allocation9 + $0xe0] sm:$0xff] %v501
      %534 = vst [vmem:[#allocation9 + $0xe8] sm:$0xff] %v502
      %535 = vst [vmem:[#allocation9 + $0xf0] sm:$0xff] %v503
      %536 = vst [vmem:[#allocation9 + $0xf8] sm:$0xff] %v504
    $region33: #{tpu_custom_call.1} parent=1 // pred_fallthru
      _
    // Predicated region
    $region34: #{tpu_custom_call.1} parent=1 // pred_check
      _
    $region35: #{tpu_custom_call.1} parent=1 // pred_check_branch
      %538 = sbr.rel (0) target = $region37
    $region36: #{tpu_custom_call.1} parent=1 // pred_region
      %540 = vsyncadd [#allocation5], 0
      %s541 = sshll.u32 [#allocation9], 4
      %s542 = int_to_ptr.vmem [resolvable:$true] %s541
      %s543 = sshll.u32 %s3, 4
      %s544 = int_to_ptr.hbm [resolvable:$true] %s543
      %549 = dma.vmem_to_hbm [thread:$0]  %s542, 4096, %s544, [#allocation5], 512, 512, 32
    $region37: #{tpu_custom_call.1} parent=1 // pred_fallthru
      _
    // Predicated region
    $region38: #{tpu_custom_call.1} parent=1 // pred_check
      _
    $region39: #{tpu_custom_call.1} parent=1 // pred_check_branch
      %551 = sbr.rel (0) target = $region41
    $region40: #{tpu_custom_call.1} parent=1 // pred_region
      %553 = dma.done [#allocation5], 4096
    $region41: #{tpu_custom_call.1} parent=1 // pred_fallthru
      _
    %554 = vsyncpa [#allocation4], 1
    %555 = vsyncpa [#allocation7], 1
    %556 = vsyncpa [#allocation5], 1

</llo_original>
